<compile_context>
chip_gen: v5e
topology: v5e:2x2
jax: 0.10.0
libtpu: 0.0.40
codegen_flags: <defaults>
</compile_context>

<pallas_src>
import functools
import math

import jax
import jax.numpy as jnp
from jax import lax
from jax.experimental import pallas as pl
from jax.experimental.pallas import tpu as pltpu

_EPS = 1e-5  # nn.LayerNorm default


def _round_up(v, m):
    return ((v + m - 1) // m) * m


def _weight_layout(kernel_sizes):
    """Static row offsets inside the packed f32 'small weights' array."""
    rows = 0
    per_layer = []
    for K in kernel_sizes:
        per_layer.append(dict(ln_g=rows, ln_b=rows + 1,
                              dw1=rows + 2, dw2=rows + 2 + K))
        rows += 2 + 2 * K
    final = dict(ln_g=rows, ln_b=rows + 1)
    rows += 2
    return per_layer, final, rows


def _conv_offsets(kernel_sizes):
    offs = set()
    for K in kernel_sizes:
        pad = K // 2
        offs.update(o for o in range(-pad, pad + 1) if o != 0)
    return tuple(sorted(offs))


def _encoder_kernel(kernel_sizes, true_H, Hp, offsets, layer_rows, final_rows,
                    x_ref, aux_ref, sw_ref, pw_ref, o_ref):
    M = x_ref.shape[0]
    inv_H = jnp.float32(1.0 / true_H)

    x = x_ref[...].astype(jnp.float32)                    # (M, Hp)
    keep = aux_ref[:, 0:1].astype(jnp.float32)            # (M, 1), 1.0 == valid
    # Per-offset boundary masks (conv zero padding + sequence boundaries inside
    # the folded B*T axis), precomputed on the host; hoisted out of all loops.
    bmask = {off: aux_ref[:, 1 + j:2 + j].astype(jnp.float32)
             for j, off in enumerate(offsets)}

    def srow(r):                                          # (1, Hp) f32 weight row
        return sw_ref[r:r + 1, :]

    def layer_norm(v, g_row, b_row):
        # Stats over the true H channels only (padded channels are exact zeros,
        # so sums are unaffected); E[x^2]-mu^2 avoids needing a channel mask.
        s1 = jnp.sum(v, axis=-1, keepdims=True)
        s2 = jnp.sum(v * v, axis=-1, keepdims=True)
        mu = s1 * inv_H
        var = jnp.maximum(s2 * inv_H - mu * mu, 0.0)
        return (v - mu) * lax.rsqrt(var + _EPS) * g_row + b_row

    # TODO(synk): carry the tap loop in bf16 on v6e/v7x (halves VALU work) once
    # Mosaic supports packed-dtype sublane rotates; pltpu.roll along the time
    # (sublane) axis currently needs 32-bit data, so elementwise math stays f32.
    def sep_conv(h, dw_row0, pw_row0, K):
        pad = K // 2
        acc = h * srow(dw_row0 + pad)                     # center tap
        for k in range(K):                                # depthwise over rows
            off = k - pad
            if off == 0:
                continue
            shifted = pltpu.roll(h, shift=(-off) % M, axis=0)   # XLU sublane roll
            acc = acc + (shifted * bmask[off]) * srow(dw_row0 + k)
        # Pointwise Conv1d(kernel_size=1, bias=False) == lane contraction (MXU),
        # bf16 inputs (default) with f32 accumulation.
        return jnp.dot(acc.astype(pw_ref.dtype),
                       pw_ref[pw_row0:pw_row0 + Hp, :],
                       preferred_element_type=jnp.float32)

    for l, K in enumerate(kernel_sizes):
        lay = layer_rows[l]
        residual = x
        h = layer_norm(x, srow(lay["ln_g"]), srow(lay["ln_b"]))
        h = h * keep                                      # masked_fill(pad, 0)
        h = jnp.maximum(sep_conv(h, lay["dw1"], (2 * l) * Hp, K), 0.0)
        h = jnp.maximum(sep_conv(h, lay["dw2"], (2 * l + 1) * Hp, K), 0.0)
        x = residual + h

    x = layer_norm(x, srow(final_rows["ln_g"]), srow(final_rows["ln_b"]))
    o_ref[...] = (x * keep).astype(o_ref.dtype)           # x * (1 - padding_mask)


def lightspeech_encoder(x, padding_mask, params, kernel_sizes, *,
                        mxu_dtype=jnp.bfloat16, target_rows=1024):
    """x: [B, T, H] float32, padding_mask: [B, T] bool (True == pad)."""
    B, T, H = x.shape
    L = len(kernel_sizes)
    Hp = _round_up(max(H, 1), 128)        # lane axis -> multiple of 128
    Tp = _round_up(max(T, 1), 8)          # rows per sequence -> multiple of 8

    # ---- host-side padding: zero channels, masked extra time rows ----------
    xp = jnp.zeros((B, Tp, Hp), x.dtype).at[:, :T, :H].set(x)
    keep = jnp.zeros((B, Tp), jnp.float32).at[:, :T].set(
        1.0 - padding_mask.astype(jnp.float32))
    x2 = xp.reshape(B * Tp, Hp)

    # ---- batch-block / grid selection ---------------------------------------
    # >=2 grid steps when B >= 2 so both v7x TensorCores get work.
    max_bb = B if B < 2 else max(1, B // 2)
    divs = [d for d in range(1, max_bb + 1) if B % d == 0]
    # ~16 live (m_blk, Hp) f32 temporaries must fit comfortably in scoped VMEM
    # on v7x (64 MiB physical, 32 MiB scoped default).
    max_rows_vmem = max(8, (((24 << 20) // (16 * Hp * 4)) // 8) * 8)
    eff_target = min(target_rows, max_rows_vmem)
    fits = [d for d in divs if d * Tp <= eff_target]
    bb = max(fits) if fits else 1
    # TODO(synk): when B == 1 and T is very large, also split the time axis
    # across grid steps (needs halo handling for the depthwise taps).
    m_blk = bb * Tp
    grid = (B // bb,)

    # ---- aux input: keep mask + per-offset boundary masks -------------------
    offsets = _conv_offsets(kernel_sizes)
    n_off = len(offsets)
    t_in_seq = jnp.arange(Tp, dtype=jnp.int32)
    cols = [keep.reshape(B * Tp, 1)]
    for off in offsets:
        ok = ((t_in_seq + off >= 0) & (t_in_seq + off < Tp)).astype(jnp.float32)
        cols.append(jnp.tile(ok, (B,)).reshape(B * Tp, 1))
    aux = jnp.concatenate(cols, axis=1)                    # (B*Tp, 1 + n_off)

    # ---- packed weights ------------------------------------------------------
    layer_rows, final_rows, n_small = _weight_layout(kernel_sizes)
    small = jnp.zeros((n_small, Hp), jnp.float32)
    pw = jnp.zeros((2 * L * Hp, Hp), jnp.float32)
    for l, (lp, K) in enumerate(zip(params["layers"], kernel_sizes)):
        lay = layer_rows[l]
        small = small.at[lay["ln_g"], :H].set(lp["ln_g"].astype(jnp.float32))
        small = small.at[lay["ln_b"], :H].set(lp["ln_b"].astype(jnp.float32))
        small = small.at[lay["dw1"]:lay["dw1"] + K, :H].set(lp["dw1"].astype(jnp.float32))
        small = small.at[lay["dw2"]:lay["dw2"] + K, :H].set(lp["dw2"].astype(jnp.float32))
        # pointwise weights pre-transposed on the host: (C_out, C_in) -> (C_in, C_out)
        pw = pw.at[(2 * l) * Hp:(2 * l) * Hp + H, :H].set(
            jnp.asarray(lp["pw1"]).T.astype(jnp.float32))
        pw = pw.at[(2 * l + 1) * Hp:(2 * l + 1) * Hp + H, :H].set(
            jnp.asarray(lp["pw2"]).T.astype(jnp.float32))
    small = small.at[final_rows["ln_g"], :H].set(params["final_ln_g"].astype(jnp.float32))
    small = small.at[final_rows["ln_b"], :H].set(params["final_ln_b"].astype(jnp.float32))
    pw = pw.astype(mxu_dtype)   # bf16 default: full-rate MXU on v5e/v6e/v7x

    # ---- specs ---------------------------------------------------------------
    in_specs = [
        pl.BlockSpec((m_blk, Hp), lambda i: (i, 0)),
        pl.BlockSpec((m_blk, 1 + n_off), lambda i: (i, 0)),
        pl.BlockSpec((n_small, Hp), lambda i: (0, 0)),          # DMA'd once
        pl.BlockSpec((2 * L * Hp, Hp), lambda i: (0, 0)),       # DMA'd once
    ]
    out_spec = pl.BlockSpec((m_blk, Hp), lambda i: (i, 0))

    # ---- VMEM budget & cost estimate ----------------------------------------
    blk = m_blk * Hp * 4
    est = (2 * m_blk * Hp * x2.dtype.itemsize          # x block (double buffered)
           + 2 * m_blk * Hp * 4                        # out block
           + 2 * m_blk * 128 * 4                       # aux (lane padded)
           + 2 * _round_up(n_small, 8) * Hp * 4        # small weight pack
           + 2 * 2 * L * Hp * Hp * pw.dtype.itemsize   # pointwise pack
           + 16 * blk)                                 # live temporaries + spill room
    vmem_limit = int(min(max(est, 32 << 20), 60 << 20))

    M_tot = B * Tp
    flops = 0
    for K in kernel_sizes:
        flops += 2 * (2 * M_tot * Hp * Hp)             # two pointwise matmuls
        flops += 2 * (3 * K * M_tot * Hp)              # depthwise taps
        flops += 2 * 10 * M_tot * Hp                   # LN / relu / mask / residual
    flops += 10 * M_tot * Hp                           # final LayerNorm
    transcendentals = (L + 1) * M_tot
    bytes_accessed = int(x2.size * x2.dtype.itemsize + M_tot * Hp * 4
                         + aux.size * 4 + small.size * 4
                         + pw.size * pw.dtype.itemsize)

    kernel = functools.partial(_encoder_kernel, tuple(kernel_sizes), H, Hp,
                               offsets, layer_rows, final_rows)
    out2 = pl.pallas_call(
        kernel,
        out_shape=jax.ShapeDtypeStruct((B * Tp, Hp), x.dtype),
        grid=grid,
        in_specs=in_specs,
        out_specs=out_spec,
        compiler_params=pltpu.CompilerParams(
            dimension_semantics=("parallel",),
            vmem_limit_bytes=vmem_limit),
        cost_estimate=pl.CostEstimate(flops=int(flops),
                                      transcendentals=int(transcendentals),
                                      bytes_accessed=bytes_accessed),
    )(x2, aux, small, pw)
    return out2.reshape(B, Tp, Hp)[:, :T, :H]


def init_params(key, dim, kernel_sizes, dropout=0.0):
    layers = []
    for K in kernel_sizes:
        # ConvSeparable init from LightSpeech: std = sqrt(4*(1-p) / (K * C))
        std = math.sqrt((4.0 * (1.0 - dropout)) / (K * dim))
        key, k1, k2, k3, k4 = jax.random.split(key, 5)
        layers.append(dict(
            ln_g=jnp.ones((dim,), jnp.float32),
            ln_b=jnp.zeros((dim,), jnp.float32),
            # PyTorch depthwise Conv1d weight (C, 1, K) -> stored as (K, C)
            dw1=(std * jax.random.normal(k1, (dim, K))).T.astype(jnp.float32),
            # PyTorch pointwise Conv1d weight (C_out, C_in, 1) -> (C_out, C_in)
            pw1=(std * jax.random.normal(k2, (dim, dim))).astype(jnp.float32),
            dw2=(std * jax.random.normal(k3, (dim, K))).T.astype(jnp.float32),
            pw2=(std * jax.random.normal(k4, (dim, dim))).astype(jnp.float32),
        ))
    return dict(layers=layers,
                final_ln_g=jnp.ones((dim,), jnp.float32),
                final_ln_b=jnp.zeros((dim,), jnp.float32))


def reference(x, padding_mask, params, kernel_sizes):
    """Pure-JAX reference mirroring the PyTorch forward (eval mode)."""
    B, T, H = x.shape
    keep = (1.0 - padding_mask.astype(jnp.float32))[..., None]

    def ln(v, g, b):
        mu = v.mean(-1, keepdims=True)
        var = ((v - mu) ** 2).mean(-1, keepdims=True)
        return (v - mu) / jnp.sqrt(var + _EPS) * g + b

    def sep(v, dw, pw, K):
        pad = K // 2
        vp = jnp.pad(v, ((0, 0), (pad, pad), (0, 0)))
        acc = sum(vp[:, k:k + T, :] * dw[k] for k in range(K))
        return jnp.einsum("bth,oh->bto", acc, pw)

    for lp, K in zip(params["layers"], kernel_sizes):
        res = x
        h = ln(x, lp["ln_g"], lp["ln_b"]) * keep
        h = jax.nn.relu(sep(h, lp["dw1"], lp["pw1"], K))
        h = jax.nn.relu(sep(h, lp["dw2"], lp["pw2"], K))
        x = res + h
    x = ln(x, params["final_ln_g"], params["final_ln_b"]) * keep
    return x


if __name__ == "__main__":
    B, T, H = 2, 16, 32
    kernel_sizes = (5, 3)

    key = jax.random.PRNGKey(0)
    key, kx = jax.random.split(key)
    x = jax.random.normal(kx, (B, T, H), dtype=jnp.float32)

    lengths = jnp.array([T, 11], dtype=jnp.int32)
    padding_mask = jnp.arange(T)[None, :] >= lengths[:, None]   # [B, T] bool, True == pad

    params = init_params(key, H, kernel_sizes, dropout=0.0)
    ref = reference(x, padding_mask, params, kernel_sizes)

    # Default path: bf16 MXU inputs (full rate on v5e/v6e/v7x), f32 accumulation
    # and f32 elementwise math.  bf16 weights are a documented precision choice
    # for inference (~1e-2 relative error vs the f32 PyTorch model).
    out = lightspeech_encoder(x, padding_mask, params, kernel_sizes)
    out = jax.block_until_ready(out)
    assert out.shape == (B, T, H)
    assert jnp.allclose(out, ref, atol=2e-2, rtol=2e-2), "bf16-MXU mismatch vs reference"

    # Full-f32 MXU path kept for validation only (multi-pass / slow on v5e/v6e MXU).
    out_f32 = lightspeech_encoder(x, padding_mask, params, kernel_sizes,
                                  mxu_dtype=jnp.float32)
    out_f32 = jax.block_until_ready(out_f32)
    assert jnp.allclose(out_f32, ref, atol=2e-4, rtol=2e-4), "f32 mismatch vs reference"

    print("KERNEL_OK")
</pallas_src>

<mosaic_0001>
module attributes {stable_mosaic.version = 11 : i64} {
  func.func @_encoder_kernel(%arg0: i32, %arg1: memref<16x128xf32, #tpu.memory_space<vmem>>, %arg2: memref<16x5xf32, #tpu.memory_space<vmem>>, %arg3: memref<22x128xf32, #tpu.memory_space<vmem>>, %arg4: memref<512x128xbf16, #tpu.memory_space<vmem>>, %arg5: memref<16x128xf32, #tpu.memory_space<vmem>>) attributes {dimension_semantics = [#tpu.dimension_semantics<parallel>], iteration_bounds = array<i64: 2>, scalar_prefetch = 0 : i64, scratch_operands = 0 : i64, tpu.core_type = #tpu.core_type<tc>, window_params = [{transform_indices = @transform_0, window_bounds = array<i64: 16, 128>}, {transform_indices = @transform_1, window_bounds = array<i64: 16, 5>}, {pipeline_mode = #tpu.pipeline_mode<synchronous>, transform_indices = @transform_2, window_bounds = array<i64: 22, 128>}, {pipeline_mode = #tpu.pipeline_mode<synchronous>, transform_indices = @transform_3, window_bounds = array<i64: 512, 128>}, {transform_indices = @transform_4, window_bounds = array<i64: 16, 128>}]} {
    %c0 = arith.constant 0 : index
    %c0_0 = arith.constant 0 : index
    %0 = vector.load %arg1[%c0, %c0_0] : memref<16x128xf32, #tpu.memory_space<vmem>>, vector<16x128xf32>
    %c0_1 = arith.constant 0 : index
    %c0_2 = arith.constant 0 : index
    %1 = vector.load %arg2[%c0_1, %c0_2] : memref<16x5xf32, #tpu.memory_space<vmem>>, vector<16x1xf32>
    %c0_3 = arith.constant 0 : index
    %c1 = arith.constant 1 : index
    %2 = vector.load %arg2[%c0_3, %c1] : memref<16x5xf32, #tpu.memory_space<vmem>>, vector<16x1xf32>
    %c0_4 = arith.constant 0 : index
    %c2 = arith.constant 2 : index
    %3 = vector.load %arg2[%c0_4, %c2] : memref<16x5xf32, #tpu.memory_space<vmem>>, vector<16x1xf32>
    %c0_5 = arith.constant 0 : index
    %c3 = arith.constant 3 : index
    %4 = vector.load %arg2[%c0_5, %c3] : memref<16x5xf32, #tpu.memory_space<vmem>>, vector<16x1xf32>
    %c0_6 = arith.constant 0 : index
    %c4 = arith.constant 4 : index
    %5 = vector.load %arg2[%c0_6, %c4] : memref<16x5xf32, #tpu.memory_space<vmem>>, vector<16x1xf32>
    %c0_7 = arith.constant 0 : index
    %c0_8 = arith.constant 0 : index
    %6 = vector.load %arg3[%c0_7, %c0_8] : memref<22x128xf32, #tpu.memory_space<vmem>>, vector<1x128xf32>
    %c1_9 = arith.constant 1 : index
    %c0_10 = arith.constant 0 : index
    %7 = vector.load %arg3[%c1_9, %c0_10] : memref<22x128xf32, #tpu.memory_space<vmem>>, vector<1x128xf32>
    %cst = arith.constant dense<0.000000e+00> : vector<16xf32>
    %8 = vector.multi_reduction <add>, %0, %cst [1] : vector<16x128xf32> to vector<16xf32>
    %9 = vector.shape_cast %8 : vector<16xf32> to vector<16x1xf32>
    %10 = arith.mulf %0, %0 : vector<16x128xf32>
    %cst_11 = arith.constant dense<0.000000e+00> : vector<16xf32>
    %11 = vector.multi_reduction <add>, %10, %cst_11 [1] : vector<16x128xf32> to vector<16xf32>
    %12 = vector.shape_cast %11 : vector<16xf32> to vector<16x1xf32>
    %cst_12 = arith.constant 3.125000e-02 : f32
    %13 = vector.broadcast %cst_12 : f32 to vector<16x1xf32>
    %14 = arith.mulf %9, %13 : vector<16x1xf32>
    %cst_13 = arith.constant 3.125000e-02 : f32
    %15 = vector.broadcast %cst_13 : f32 to vector<16x1xf32>
    %16 = arith.mulf %12, %15 : vector<16x1xf32>
    %17 = arith.mulf %14, %14 : vector<16x1xf32>
    %18 = arith.subf %16, %17 : vector<16x1xf32>
    %cst_14 = arith.constant 0.000000e+00 : f32
    %19 = vector.broadcast %cst_14 : f32 to vector<16x1xf32>
    %20 = arith.maximumf %18, %19 : vector<16x1xf32>
    %21 = vector.broadcast %14 : vector<16x1xf32> to vector<16x128xf32>
    %22 = arith.subf %0, %21 : vector<16x128xf32>
    %cst_15 = arith.constant 9.99999974E-6 : f32
    %23 = vector.broadcast %cst_15 : f32 to vector<16x1xf32>
    %24 = arith.addf %20, %23 : vector<16x1xf32>
    %25 = math.rsqrt %24 : vector<16x1xf32>
    %26 = vector.broadcast %25 : vector<16x1xf32> to vector<16x128xf32>
    %27 = arith.mulf %22, %26 : vector<16x128xf32>
    %28 = vector.broadcast %6 : vector<1x128xf32> to vector<16x128xf32>
    %29 = arith.mulf %27, %28 : vector<16x128xf32>
    %30 = vector.broadcast %7 : vector<1x128xf32> to vector<16x128xf32>
    %31 = arith.addf %29, %30 : vector<16x128xf32>
    %32 = vector.broadcast %1 : vector<16x1xf32> to vector<16x128xf32>
    %33 = arith.mulf %31, %32 : vector<16x128xf32>
    %c4_16 = arith.constant 4 : index
    %c0_17 = arith.constant 0 : index
    %34 = vector.load %arg3[%c4_16, %c0_17] : memref<22x128xf32, #tpu.memory_space<vmem>>, vector<1x128xf32>
    %35 = vector.broadcast %34 : vector<1x128xf32> to vector<16x128xf32>
    %36 = arith.mulf %33, %35 : vector<16x128xf32>
    %c2_i32 = arith.constant 2 : i32
    %37 = tpu.dynamic_rotate %33 by %c2_i32 dim 0 : vector<16x128xf32>, i32 -> vector<16x128xf32>
    %38 = vector.broadcast %2 : vector<16x1xf32> to vector<16x128xf32>
    %39 = arith.mulf %37, %38 : vector<16x128xf32>
    %c2_18 = arith.constant 2 : index
    %c0_19 = arith.constant 0 : index
    %40 = vector.load %arg3[%c2_18, %c0_19] : memref<22x128xf32, #tpu.memory_space<vmem>>, vector<1x128xf32>
    %41 = vector.broadcast %40 : vector<1x128xf32> to vector<16x128xf32>
    %42 = arith.mulf %39, %41 : vector<16x128xf32>
    %43 = arith.addf %36, %42 : vector<16x128xf32>
    %c1_i32 = arith.constant 1 : i32
    %44 = tpu.dynamic_rotate %33 by %c1_i32 dim 0 : vector<16x128xf32>, i32 -> vector<16x128xf32>
    %45 = vector.broadcast %3 : vector<16x1xf32> to vector<16x128xf32>
    %46 = arith.mulf %44, %45 : vector<16x128xf32>
    %c3_20 = arith.constant 3 : index
    %c0_21 = arith.constant 0 : index
    %47 = vector.load %arg3[%c3_20, %c0_21] : memref<22x128xf32, #tpu.memory_space<vmem>>, vector<1x128xf32>
    %48 = vector.broadcast %47 : vector<1x128xf32> to vector<16x128xf32>
    %49 = arith.mulf %46, %48 : vector<16x128xf32>
    %50 = arith.addf %43, %49 : vector<16x128xf32>
    %c15_i32 = arith.constant 15 : i32
    %51 = tpu.dynamic_rotate %33 by %c15_i32 dim 0 : vector<16x128xf32>, i32 -> vector<16x128xf32>
    %52 = vector.broadcast %4 : vector<16x1xf32> to vector<16x128xf32>
    %53 = arith.mulf %51, %52 : vector<16x128xf32>
    %c5 = arith.constant 5 : index
    %c0_22 = arith.constant 0 : index
    %54 = vector.load %arg3[%c5, %c0_22] : memref<22x128xf32, #tpu.memory_space<vmem>>, vector<1x128xf32>
    %55 = vector.broadcast %54 : vector<1x128xf32> to vector<16x128xf32>
    %56 = arith.mulf %53, %55 : vector<16x128xf32>
    %57 = arith.addf %50, %56 : vector<16x128xf32>
    %c14_i32 = arith.constant 14 : i32
    %58 = tpu.dynamic_rotate %33 by %c14_i32 dim 0 : vector<16x128xf32>, i32 -> vector<16x128xf32>
    %59 = vector.broadcast %5 : vector<16x1xf32> to vector<16x128xf32>
    %60 = arith.mulf %58, %59 : vector<16x128xf32>
    %c6 = arith.constant 6 : index
    %c0_23 = arith.constant 0 : index
    %61 = vector.load %arg3[%c6, %c0_23] : memref<22x128xf32, #tpu.memory_space<vmem>>, vector<1x128xf32>
    %62 = vector.broadcast %61 : vector<1x128xf32> to vector<16x128xf32>
    %63 = arith.mulf %60, %62 : vector<16x128xf32>
    %64 = arith.addf %57, %63 : vector<16x128xf32>
    %65 = arith.truncf %64 : vector<16x128xf32> to vector<16x128xbf16>
    %c0_24 = arith.constant 0 : index
    %c0_25 = arith.constant 0 : index
    %66 = vector.load %arg4[%c0_24, %c0_25] : memref<512x128xbf16, #tpu.memory_space<vmem>>, vector<128x128xbf16>
    %cst_26 = arith.constant dense<0.000000e+00> : vector<16x128xf32>
    %67 = tpu.matmul %65, %66, %cst_26 {dimension_numbers = #tpu.dot_dimension_numbers<[1], [0], [0], [1], [0, 0, 1, 1], [], []>} : vector<16x128xbf16>, vector<128x128xbf16>, vector<16x128xf32> -> vector<16x128xf32>
    %cst_27 = arith.constant 0.000000e+00 : f32
    %68 = vector.broadcast %cst_27 : f32 to vector<16x128xf32>
    %69 = arith.maximumf %67, %68 : vector<16x128xf32>
    %c9 = arith.constant 9 : index
    %c0_28 = arith.constant 0 : index
    %70 = vector.load %arg3[%c9, %c0_28] : memref<22x128xf32, #tpu.memory_space<vmem>>, vector<1x128xf32>
    %71 = vector.broadcast %70 : vector<1x128xf32> to vector<16x128xf32>
    %72 = arith.mulf %69, %71 : vector<16x128xf32>
    %c2_i32_29 = arith.constant 2 : i32
    %73 = tpu.dynamic_rotate %69 by %c2_i32_29 dim 0 : vector<16x128xf32>, i32 -> vector<16x128xf32>
    %74 = vector.broadcast %2 : vector<16x1xf32> to vector<16x128xf32>
    %75 = arith.mulf %73, %74 : vector<16x128xf32>
    %c7 = arith.constant 7 : index
    %c0_30 = arith.constant 0 : index
    %76 = vector.load %arg3[%c7, %c0_30] : memref<22x128xf32, #tpu.memory_space<vmem>>, vector<1x128xf32>
    %77 = vector.broadcast %76 : vector<1x128xf32> to vector<16x128xf32>
    %78 = arith.mulf %75, %77 : vector<16x128xf32>
    %79 = arith.addf %72, %78 : vector<16x128xf32>
    %c1_i32_31 = arith.constant 1 : i32
    %80 = tpu.dynamic_rotate %69 by %c1_i32_31 dim 0 : vector<16x128xf32>, i32 -> vector<16x128xf32>
    %81 = vector.broadcast %3 : vector<16x1xf32> to vector<16x128xf32>
    %82 = arith.mulf %80, %81 : vector<16x128xf32>
    %c8 = arith.constant 8 : index
    %c0_32 = arith.constant 0 : index
    %83 = vector.load %arg3[%c8, %c0_32] : memref<22x128xf32, #tpu.memory_space<vmem>>, vector<1x128xf32>
    %84 = vector.broadcast %83 : vector<1x128xf32> to vector<16x128xf32>
    %85 = arith.mulf %82, %84 : vector<16x128xf32>
    %86 = arith.addf %79, %85 : vector<16x128xf32>
    %c15_i32_33 = arith.constant 15 : i32
    %87 = tpu.dynamic_rotate %69 by %c15_i32_33 dim 0 : vector<16x128xf32>, i32 -> vector<16x128xf32>
    %88 = vector.broadcast %4 : vector<16x1xf32> to vector<16x128xf32>
    %89 = arith.mulf %87, %88 : vector<16x128xf32>
    %c10 = arith.constant 10 : index
    %c0_34 = arith.constant 0 : index
    %90 = vector.load %arg3[%c10, %c0_34] : memref<22x128xf32, #tpu.memory_space<vmem>>, vector<1x128xf32>
    %91 = vector.broadcast %90 : vector<1x128xf32> to vector<16x128xf32>
    %92 = arith.mulf %89, %91 : vector<16x128xf32>
    %93 = arith.addf %86, %92 : vector<16x128xf32>
    %c14_i32_35 = arith.constant 14 : i32
    %94 = tpu.dynamic_rotate %69 by %c14_i32_35 dim 0 : vector<16x128xf32>, i32 -> vector<16x128xf32>
    %95 = vector.broadcast %5 : vector<16x1xf32> to vector<16x128xf32>
    %96 = arith.mulf %94, %95 : vector<16x128xf32>
    %c11 = arith.constant 11 : index
    %c0_36 = arith.constant 0 : index
    %97 = vector.load %arg3[%c11, %c0_36] : memref<22x128xf32, #tpu.memory_space<vmem>>, vector<1x128xf32>
    %98 = vector.broadcast %97 : vector<1x128xf32> to vector<16x128xf32>
    %99 = arith.mulf %96, %98 : vector<16x128xf32>
    %100 = arith.addf %93, %99 : vector<16x128xf32>
    %101 = arith.truncf %100 : vector<16x128xf32> to vector<16x128xbf16>
    %c128 = arith.constant 128 : index
    %c0_37 = arith.constant 0 : index
    %102 = vector.load %arg4[%c128, %c0_37] : memref<512x128xbf16, #tpu.memory_space<vmem>>, vector<128x128xbf16>
    %cst_38 = arith.constant dense<0.000000e+00> : vector<16x128xf32>
    %103 = tpu.matmul %101, %102, %cst_38 {dimension_numbers = #tpu.dot_dimension_numbers<[1], [0], [0], [1], [0, 0, 1, 1], [], []>} : vector<16x128xbf16>, vector<128x128xbf16>, vector<16x128xf32> -> vector<16x128xf32>
    %cst_39 = arith.constant 0.000000e+00 : f32
    %104 = vector.broadcast %cst_39 : f32 to vector<16x128xf32>
    %105 = arith.maximumf %103, %104 : vector<16x128xf32>
    %106 = arith.addf %0, %105 : vector<16x128xf32>
    %c12 = arith.constant 12 : index
    %c0_40 = arith.constant 0 : index
    %107 = vector.load %arg3[%c12, %c0_40] : memref<22x128xf32, #tpu.memory_space<vmem>>, vector<1x128xf32>
    %c13 = arith.constant 13 : index
    %c0_41 = arith.constant 0 : index
    %108 = vector.load %arg3[%c13, %c0_41] : memref<22x128xf32, #tpu.memory_space<vmem>>, vector<1x128xf32>
    %cst_42 = arith.constant dense<0.000000e+00> : vector<16xf32>
    %109 = vector.multi_reduction <add>, %106, %cst_42 [1] : vector<16x128xf32> to vector<16xf32>
    %110 = vector.shape_cast %109 : vector<16xf32> to vector<16x1xf32>
    %111 = arith.mulf %106, %106 : vector<16x128xf32>
    %cst_43 = arith.constant dense<0.000000e+00> : vector<16xf32>
    %112 = vector.multi_reduction <add>, %111, %cst_43 [1] : vector<16x128xf32> to vector<16xf32>
    %113 = vector.shape_cast %112 : vector<16xf32> to vector<16x1xf32>
    %cst_44 = arith.constant 3.125000e-02 : f32
    %114 = vector.broadcast %cst_44 : f32 to vector<16x1xf32>
    %115 = arith.mulf %110, %114 : vector<16x1xf32>
    %cst_45 = arith.constant 3.125000e-02 : f32
    %116 = vector.broadcast %cst_45 : f32 to vector<16x1xf32>
    %117 = arith.mulf %113, %116 : vector<16x1xf32>
    %118 = arith.mulf %115, %115 : vector<16x1xf32>
    %119 = arith.subf %117, %118 : vector<16x1xf32>
    %cst_46 = arith.constant 0.000000e+00 : f32
    %120 = vector.broadcast %cst_46 : f32 to vector<16x1xf32>
    %121 = arith.maximumf %119, %120 : vector<16x1xf32>
    %122 = vector.broadcast %115 : vector<16x1xf32> to vector<16x128xf32>
    %123 = arith.subf %106, %122 : vector<16x128xf32>
    %cst_47 = arith.constant 9.99999974E-6 : f32
    %124 = vector.broadcast %cst_47 : f32 to vector<16x1xf32>
    %125 = arith.addf %121, %124 : vector<16x1xf32>
    %126 = math.rsqrt %125 : vector<16x1xf32>
    %127 = vector.broadcast %126 : vector<16x1xf32> to vector<16x128xf32>
    %128 = arith.mulf %123, %127 : vector<16x128xf32>
    %129 = vector.broadcast %107 : vector<1x128xf32> to vector<16x128xf32>
    %130 = arith.mulf %128, %129 : vector<16x128xf32>
    %131 = vector.broadcast %108 : vector<1x128xf32> to vector<16x128xf32>
    %132 = arith.addf %130, %131 : vector<16x128xf32>
    %133 = vector.broadcast %1 : vector<16x1xf32> to vector<16x128xf32>
    %134 = arith.mulf %132, %133 : vector<16x128xf32>
    %c15 = arith.constant 15 : index
    %c0_48 = arith.constant 0 : index
    %135 = vector.load %arg3[%c15, %c0_48] : memref<22x128xf32, #tpu.memory_space<vmem>>, vector<1x128xf32>
    %136 = vector.broadcast %135 : vector<1x128xf32> to vector<16x128xf32>
    %137 = arith.mulf %134, %136 : vector<16x128xf32>
    %c1_i32_49 = arith.constant 1 : i32
    %138 = tpu.dynamic_rotate %134 by %c1_i32_49 dim 0 : vector<16x128xf32>, i32 -> vector<16x128xf32>
    %139 = vector.broadcast %3 : vector<16x1xf32> to vector<16x128xf32>
    %140 = arith.mulf %138, %139 : vector<16x128xf32>
    %c14 = arith.constant 14 : index
    %c0_50 = arith.constant 0 : index
    %141 = vector.load %arg3[%c14, %c0_50] : memref<22x128xf32, #tpu.memory_space<vmem>>, vector<1x128xf32>
    %142 = vector.broadcast %141 : vector<1x128xf32> to vector<16x128xf32>
    %143 = arith.mulf %140, %142 : vector<16x128xf32>
    %144 = arith.addf %137, %143 : vector<16x128xf32>
    %c15_i32_51 = arith.constant 15 : i32
    %145 = tpu.dynamic_rotate %134 by %c15_i32_51 dim 0 : vector<16x128xf32>, i32 -> vector<16x128xf32>
    %146 = vector.broadcast %4 : vector<16x1xf32> to vector<16x128xf32>
    %147 = arith.mulf %145, %146 : vector<16x128xf32>
    %c16 = arith.constant 16 : index
    %c0_52 = arith.constant 0 : index
    %148 = vector.load %arg3[%c16, %c0_52] : memref<22x128xf32, #tpu.memory_space<vmem>>, vector<1x128xf32>
    %149 = vector.broadcast %148 : vector<1x128xf32> to vector<16x128xf32>
    %150 = arith.mulf %147, %149 : vector<16x128xf32>
    %151 = arith.addf %144, %150 : vector<16x128xf32>
    %152 = arith.truncf %151 : vector<16x128xf32> to vector<16x128xbf16>
    %c256 = arith.constant 256 : index
    %c0_53 = arith.constant 0 : index
    %153 = vector.load %arg4[%c256, %c0_53] : memref<512x128xbf16, #tpu.memory_space<vmem>>, vector<128x128xbf16>
    %cst_54 = arith.constant dense<0.000000e+00> : vector<16x128xf32>
    %154 = tpu.matmul %152, %153, %cst_54 {dimension_numbers = #tpu.dot_dimension_numbers<[1], [0], [0], [1], [0, 0, 1, 1], [], []>} : vector<16x128xbf16>, vector<128x128xbf16>, vector<16x128xf32> -> vector<16x128xf32>
    %cst_55 = arith.constant 0.000000e+00 : f32
    %155 = vector.broadcast %cst_55 : f32 to vector<16x128xf32>
    %156 = arith.maximumf %154, %155 : vector<16x128xf32>
    %c18 = arith.constant 18 : index
    %c0_56 = arith.constant 0 : index
    %157 = vector.load %arg3[%c18, %c0_56] : memref<22x128xf32, #tpu.memory_space<vmem>>, vector<1x128xf32>
    %158 = vector.broadcast %157 : vector<1x128xf32> to vector<16x128xf32>
    %159 = arith.mulf %156, %158 : vector<16x128xf32>
    %c1_i32_57 = arith.constant 1 : i32
    %160 = tpu.dynamic_rotate %156 by %c1_i32_57 dim 0 : vector<16x128xf32>, i32 -> vector<16x128xf32>
    %161 = vector.broadcast %3 : vector<16x1xf32> to vector<16x128xf32>
    %162 = arith.mulf %160, %161 : vector<16x128xf32>
    %c17 = arith.constant 17 : index
    %c0_58 = arith.constant 0 : index
    %163 = vector.load %arg3[%c17, %c0_58] : memref<22x128xf32, #tpu.memory_space<vmem>>, vector<1x128xf32>
    %164 = vector.broadcast %163 : vector<1x128xf32> to vector<16x128xf32>
    %165 = arith.mulf %162, %164 : vector<16x128xf32>
    %166 = arith.addf %159, %165 : vector<16x128xf32>
    %c15_i32_59 = arith.constant 15 : i32
    %167 = tpu.dynamic_rotate %156 by %c15_i32_59 dim 0 : vector<16x128xf32>, i32 -> vector<16x128xf32>
    %168 = vector.broadcast %4 : vector<16x1xf32> to vector<16x128xf32>
    %169 = arith.mulf %167, %168 : vector<16x128xf32>
    %c19 = arith.constant 19 : index
    %c0_60 = arith.constant 0 : index
    %170 = vector.load %arg3[%c19, %c0_60] : memref<22x128xf32, #tpu.memory_space<vmem>>, vector<1x128xf32>
    %171 = vector.broadcast %170 : vector<1x128xf32> to vector<16x128xf32>
    %172 = arith.mulf %169, %171 : vector<16x128xf32>
    %173 = arith.addf %166, %172 : vector<16x128xf32>
    %174 = arith.truncf %173 : vector<16x128xf32> to vector<16x128xbf16>
    %c384 = arith.constant 384 : index
    %c0_61 = arith.constant 0 : index
    %175 = vector.load %arg4[%c384, %c0_61] : memref<512x128xbf16, #tpu.memory_space<vmem>>, vector<128x128xbf16>
    %cst_62 = arith.constant dense<0.000000e+00> : vector<16x128xf32>
    %176 = tpu.matmul %174, %175, %cst_62 {dimension_numbers = #tpu.dot_dimension_numbers<[1], [0], [0], [1], [0, 0, 1, 1], [], []>} : vector<16x128xbf16>, vector<128x128xbf16>, vector<16x128xf32> -> vector<16x128xf32>
    %cst_63 = arith.constant 0.000000e+00 : f32
    %177 = vector.broadcast %cst_63 : f32 to vector<16x128xf32>
    %178 = arith.maximumf %176, %177 : vector<16x128xf32>
    %179 = arith.addf %106, %178 : vector<16x128xf32>
    %c20 = arith.constant 20 : index
    %c0_64 = arith.constant 0 : index
    %180 = vector.load %arg3[%c20, %c0_64] : memref<22x128xf32, #tpu.memory_space<vmem>>, vector<1x128xf32>
    %c21 = arith.constant 21 : index
    %c0_65 = arith.constant 0 : index
    %181 = vector.load %arg3[%c21, %c0_65] : memref<22x128xf32, #tpu.memory_space<vmem>>, vector<1x128xf32>
    %cst_66 = arith.constant dense<0.000000e+00> : vector<16xf32>
    %182 = vector.multi_reduction <add>, %179, %cst_66 [1] : vector<16x128xf32> to vector<16xf32>
    %183 = vector.shape_cast %182 : vector<16xf32> to vector<16x1xf32>
    %184 = arith.mulf %179, %179 : vector<16x128xf32>
    %cst_67 = arith.constant dense<0.000000e+00> : vector<16xf32>
    %185 = vector.multi_reduction <add>, %184, %cst_67 [1] : vector<16x128xf32> to vector<16xf32>
    %186 = vector.shape_cast %185 : vector<16xf32> to vector<16x1xf32>
    %cst_68 = arith.constant 3.125000e-02 : f32
    %187 = vector.broadcast %cst_68 : f32 to vector<16x1xf32>
    %188 = arith.mulf %183, %187 : vector<16x1xf32>
    %cst_69 = arith.constant 3.125000e-02 : f32
    %189 = vector.broadcast %cst_69 : f32 to vector<16x1xf32>
    %190 = arith.mulf %186, %189 : vector<16x1xf32>
    %191 = arith.mulf %188, %188 : vector<16x1xf32>
    %192 = arith.subf %190, %191 : vector<16x1xf32>
    %cst_70 = arith.constant 0.000000e+00 : f32
    %193 = vector.broadcast %cst_70 : f32 to vector<16x1xf32>
    %194 = arith.maximumf %192, %193 : vector<16x1xf32>
    %195 = vector.broadcast %188 : vector<16x1xf32> to vector<16x128xf32>
    %196 = arith.subf %179, %195 : vector<16x128xf32>
    %cst_71 = arith.constant 9.99999974E-6 : f32
    %197 = vector.broadcast %cst_71 : f32 to vector<16x1xf32>
    %198 = arith.addf %194, %197 : vector<16x1xf32>
    %199 = math.rsqrt %198 : vector<16x1xf32>
    %200 = vector.broadcast %199 : vector<16x1xf32> to vector<16x128xf32>
    %201 = arith.mulf %196, %200 : vector<16x128xf32>
    %202 = vector.broadcast %180 : vector<1x128xf32> to vector<16x128xf32>
    %203 = arith.mulf %201, %202 : vector<16x128xf32>
    %204 = vector.broadcast %181 : vector<1x128xf32> to vector<16x128xf32>
    %205 = arith.addf %203, %204 : vector<16x128xf32>
    %206 = vector.broadcast %1 : vector<16x1xf32> to vector<16x128xf32>
    %207 = arith.mulf %205, %206 : vector<16x128xf32>
    %c0_72 = arith.constant 0 : index
    %c0_73 = arith.constant 0 : index
    %208 = vector.load %arg5[%c0_72, %c0_73] : memref<16x128xf32, #tpu.memory_space<vmem>>, vector<16x128xf32>
    tpu.vector_store %arg5[%c0_72, %c0_73], %207 {strides = array<i32>} : memref<16x128xf32, #tpu.memory_space<vmem>>, vector<16x128xf32>,
    return
  }
  func.func @transform_0(%arg0: i32) -> (i32, i32) {
    %c0_i32 = arith.constant 0 : i32
    %c0_i32_0 = arith.constant 0 : i32
    return %arg0, %c0_i32 : i32, i32
  }
  func.func @transform_1(%arg0: i32) -> (i32, i32) {
    %c0_i32 = arith.constant 0 : i32
    %c0_i32_0 = arith.constant 0 : i32
    return %arg0, %c0_i32 : i32, i32
  }
  func.func @transform_2(%arg0: i32) -> (i32, i32) {
    %c0_i32 = arith.constant 0 : i32
    %c0_i32_0 = arith.constant 0 : i32
    %c0_i32_1 = arith.constant 0 : i32
    return %c0_i32, %c0_i32_0 : i32, i32
  }
  func.func @transform_3(%arg0: i32) -> (i32, i32) {
    %c0_i32 = arith.constant 0 : i32
    %c0_i32_0 = arith.constant 0 : i32
    %c0_i32_1 = arith.constant 0 : i32
    return %c0_i32, %c0_i32_0 : i32, i32
  }
  func.func @transform_4(%arg0: i32) -> (i32, i32) {
    %c0_i32 = arith.constant 0 : i32
    %c0_i32_0 = arith.constant 0 : i32
    return %arg0, %c0_i32 : i32, i32
  }
}

</mosaic_0001>

<llo_original>
// kernel: tpu_custom_call.1
$region0: #{tpu_custom_call.1}
  #allocation0 [shape = 'u32[]', space=smem, size = 0x4, offset = 0x4, fixed_abs, tag = 'smem constant byte address 0x4 - core index']
  #allocation1 [shape = 'u32[72,128]{1,0:T(1,128)}', space=vmem, size = 0x9000, scoped, tag = 'internal scratch']
  %s0 = inlined_call_operand.vmem [shape: f32[32,128], index: 0, kind: input, shape index: {}]
  %s1 = inlined_call_operand.vmem [shape: f32[32,5], index: 1, kind: input, shape index: {}]
  %s2 = inlined_call_operand.hbm [shape: f32[22,128], index: 2, kind: input, shape index: {}]
  %s3 = inlined_call_operand.hbm [shape: bf16[512,128], index: 3, kind: input, shape index: {}]
  %s4 = inlined_call_operand.hbm [shape: f32[32,128], index: 4, kind: output, shape index: {}]
  %s5 = sld [smem:[#allocation0]]
  $region57: #{tpu_custom_call.1} parent=0
    _
  %s7 = ssub.s32 1, %s5
  %s8 = scalar_select 0, %s7, %s5
  $region1: #{tpu_custom_call.1} parent=0
    #allocation2 [shape = 'u8[12288]{0}', space=vmem, size = 0x3000, scoped, tag = 'input window, operand 2, single buffered']
    #allocation3 [shape = 's32[2]{0}', space=sflag, size = 0x8, scoped, tag = 'scoped memory for tpu_custom_call.1']
    #allocation4 [shape = 's32[2]{0}', space=sflag, size = 0x8, scoped, tag = 'scoped memory for tpu_custom_call.1']
    #allocation5 [shape = 'u8[131072]{0}', space=vmem, size = 0x20000, scoped, tag = 'input window, operand 3, single buffered']
    #allocation6 [shape = 's32[1]{0}', space=sflag, size = 0x4, scoped, tag = 'scoped memory for tpu_custom_call.1']
    #allocation7 [shape = 'u8[16384]{0}', space=vmem, size = 0x4000, scoped, tag = 'output window, operand 0']
    %9 = vsyncpa [#allocation3], 0
    %10 = vsyncpa [#allocation6], 0
    %11 = vsyncpa [#allocation4], 0
    %s12 = scalar_lea.sflag [#allocation4], 1
    %13 = vsyncpa %s12, 0
    loop: start=0, step=1, limit=4
    $region2: #{tpu_custom_call.1} parent=1 // loop_pre_header
      _
    $region3: #{tpu_custom_call.1} parent=1 // loop_header
      %s15 = sphi 0, %s19
      %p16 = scmp.ge.s32.totalorder %s15, 4
      %s25 = sphi 0, %s27
      %s28 = sphi 0, %s25
      %s29 = sphi 0, %s28
      %s45 = sphi 0, %s29
      %s51 = sphi 0, %s53
      %s54 = sphi 0, %s51
      %s55 = sphi 0, %s54
      %s71 = sphi 0, %s55
      %s75 = sphi 0, %s75
      %s77 = sphi 0, %s75
      %s78 = sphi 0, %s77
      %s92 = sphi 0, %s78
      %s96 = sphi 0, %s96
      %s98 = sphi 0, %s96
      %s99 = sphi 0, %s98
      %s113 = sphi 0, %s99
      %s119 = sphi 0, %s121
      %s122 = sphi 0, %s119
      %s123 = sphi 0, %s122
      %s139 = sphi 0, %s123
    $region4: #{tpu_custom_call.1} parent=1 // loop_header_branch
      %18 = sbr.rel (%p16) target = $region8
    $region5: #{tpu_custom_call.1} parent=1 // loop_body
      %s20 = ssub.s32 %s15, 1
      %s21 = ssub.s32 %s15, 2
      %s22 = sadd.s32 %s15, 1
      %s23 = ssub.s32 %s15, %s22
      %p24 = scmp.eq.s32.totalorder %s23, 0
      %s26 = sadd.s32 %s25, 1
      %s27 = scalar_select %p24, %s25, %s26
      %p30 = pneg %p24
      %p31 = scmp.eq.s32.totalorder %s15, 1
      %p32 = por %p30, %p31
      %p33 = scmp.ne.s32.totalorder %s25, %s28
      %p34 = scmp.eq.s32.totalorder %s15, 0
      %p35 = por %p33, %p34
      %p36 = scmp.ne.s32.totalorder %s25, %s28
      %p37 = scmp.eq.s32.totalorder %s20, 1
      %p38 = por %p36, %p37
      %p39 = scmp.ne.s32.totalorder %s28, %s29
      %p40 = scmp.eq.s32.totalorder %s20, 0
      %p41 = por %p39, %p40
      %p42 = scmp.ne.s32.totalorder %s28, %s29
      %p43 = scmp.eq.s32.totalorder %s21, 1
      %p44 = por %p42, %p43
      %p46 = scmp.ne.s32.totalorder %s29, %s45
      %p47 = scmp.eq.s32.totalorder %s21, 0
      %p48 = por %p46, %p47
      %s49 = ssub.s32 %s15, %s22
      %p50 = scmp.eq.s32.totalorder %s49, 0
      %s52 = sadd.s32 %s51, 1
      %s53 = scalar_select %p50, %s51, %s52
      %p56 = pneg %p50
      %p57 = scmp.eq.s32.totalorder %s15, 1
      %p58 = por %p56, %p57
      %p59 = scmp.ne.s32.totalorder %s51, %s54
      %p60 = scmp.eq.s32.totalorder %s15, 0
      %p61 = por %p59, %p60
      %p62 = scmp.ne.s32.totalorder %s51, %s54
      %p63 = scmp.eq.s32.totalorder %s20, 1
      %p64 = por %p62, %p63
      %p65 = scmp.ne.s32.totalorder %s54, %s55
      %p66 = scmp.eq.s32.totalorder %s20, 0
      %p67 = por %p65, %p66
      %p68 = scmp.ne.s32.totalorder %s54, %s55
      %p69 = scmp.eq.s32.totalorder %s21, 1
      %p70 = por %p68, %p69
      %p72 = scmp.ne.s32.totalorder %s55, %s71
      %p73 = scmp.eq.s32.totalorder %s21, 0
      %p74 = por %p72, %p73
      %s76 = sadd.s32 %s75, 1
      %p79 = scmp.eq.s32.totalorder %s15, 1
      %p80 = scmp.ne.s32.totalorder %s75, %s77
      %p81 = scmp.eq.s32.totalorder %s15, 0
      %p82 = por %p80, %p81
      %p83 = scmp.ne.s32.totalorder %s75, %s77
      %p84 = scmp.eq.s32.totalorder %s20, 1
      %p85 = por %p83, %p84
      %p86 = scmp.ne.s32.totalorder %s77, %s78
      %p87 = scmp.eq.s32.totalorder %s20, 0
      %p88 = por %p86, %p87
      %p89 = scmp.ne.s32.totalorder %s77, %s78
      %p90 = scmp.eq.s32.totalorder %s21, 1
      %p91 = por %p89, %p90
      %p93 = scmp.ne.s32.totalorder %s78, %s92
      %p94 = scmp.eq.s32.totalorder %s21, 0
      %p95 = por %p93, %p94
      %s97 = sadd.s32 %s96, 1
      %p100 = scmp.eq.s32.totalorder %s15, 1
      %p101 = scmp.ne.s32.totalorder %s96, %s98
      %p102 = scmp.eq.s32.totalorder %s15, 0
      %p103 = por %p101, %p102
      %p104 = scmp.ne.s32.totalorder %s96, %s98
      %p105 = scmp.eq.s32.totalorder %s20, 1
      %p106 = por %p104, %p105
      %p107 = scmp.ne.s32.totalorder %s98, %s99
      %p108 = scmp.eq.s32.totalorder %s20, 0
      %p109 = por %p107, %p108
      %p110 = scmp.ne.s32.totalorder %s98, %s99
      %p111 = scmp.eq.s32.totalorder %s21, 1
      %p112 = por %p110, %p111
      %p114 = scmp.ne.s32.totalorder %s99, %s113
      %p115 = scmp.eq.s32.totalorder %s21, 0
      %p116 = por %p114, %p115
      %s117 = ssub.s32 %s15, %s22
      %p118 = scmp.eq.s32.totalorder %s117, 0
      %s120 = sadd.s32 %s119, 1
      %s121 = scalar_select %p118, %s119, %s120
      %p124 = pneg %p118
      %p125 = scmp.eq.s32.totalorder %s15, 1
      %p126 = por %p124, %p125
      %p127 = scmp.ne.s32.totalorder %s119, %s122
      %p128 = scmp.eq.s32.totalorder %s15, 0
      %p129 = por %p127, %p128
      %p130 = scmp.ne.s32.totalorder %s119, %s122
      %p131 = scmp.eq.s32.totalorder %s20, 1
      %p132 = por %p130, %p131
      %p133 = scmp.ne.s32.totalorder %s122, %s123
      %p134 = scmp.eq.s32.totalorder %s20, 0
      %p135 = por %p133, %p134
      %p136 = scmp.ne.s32.totalorder %s122, %s123
      %p137 = scmp.eq.s32.totalorder %s21, 1
      %p138 = por %p136, %p137
      %p140 = scmp.ne.s32.totalorder %s123, %s139
      %p141 = scmp.eq.s32.totalorder %s21, 0
      %p142 = por %p140, %p141
      %p143 = scmp.le.s32.totalorder 1, %s15
      %p144 = scmp.lt.s32.totalorder %s15, 3
      %p145 = pnand %p143, %p144
      %p146 = pneg %p145
      // Predicated region
      $region9: #{tpu_custom_call.1} parent=5 // pred_check
        _
      $region10: #{tpu_custom_call.1} parent=5 // pred_check_branch
        %148 = sbr.rel (%p145) target = $region12
      $region11: #{tpu_custom_call.1} parent=5 // pred_region
        %s149 = ssub.s32 %s15, 1
        // Predicated region
        $region13: #{tpu_custom_call.1} parent=11 // pred_check
          %p150 = pneg %p88
        $region14: #{tpu_custom_call.1} parent=11 // pred_check_branch
          %152 = sbr.rel (%p150) target = $region16
        $region15: #{tpu_custom_call.1} parent=11 // pred_region
          %154 = vsyncadd [#allocation3], 0
          %s155 = sshll.u32 %s2, 4
          %s156 = int_to_ptr.hbm [resolvable:$true] %s155
          %s157 = sshll.u32 [#allocation2], 4
          %s158 = int_to_ptr.vmem [resolvable:$true] %s157
          %163 = dma.hbm_to_vmem [thread:$0]  %s156, 384, %s158, [#allocation3], 128, 128, 8
        $region16: #{tpu_custom_call.1} parent=11 // pred_fallthru
          _
        // Predicated region
        $region17: #{tpu_custom_call.1} parent=11 // pred_check
          %p164 = pneg %p109
        $region18: #{tpu_custom_call.1} parent=11 // pred_check_branch
          %166 = sbr.rel (%p164) target = $region20
        $region19: #{tpu_custom_call.1} parent=11 // pred_region
          %168 = vsyncadd [#allocation6], 0
          %s169 = sshll.u32 %s3, 4
          %s170 = int_to_ptr.hbm [resolvable:$true] %s169
          %s171 = sshll.u32 [#allocation5], 4
          %s172 = int_to_ptr.vmem [resolvable:$true] %s171
          %177 = dma.hbm_to_vmem [thread:$0]  %s170, 4096, %s172, [#allocation6], 64, 64, 4
        $region20: #{tpu_custom_call.1} parent=11 // pred_fallthru
          _
      $region12: #{tpu_custom_call.1} parent=5 // pred_fallthru
        _
      %p178 = scmp.lt.s32.totalorder %s15, 2
      // Predicated region
      $region21: #{tpu_custom_call.1} parent=5 // pred_check
        %p179 = pneg %p178
      $region22: #{tpu_custom_call.1} parent=5 // pred_check_branch
        %181 = sbr.rel (%p179) target = $region24
      $region23: #{tpu_custom_call.1} parent=5 // pred_region
        // Predicated region
        $region25: #{tpu_custom_call.1} parent=23 // pred_check
          %p182 = pneg %p35
        $region26: #{tpu_custom_call.1} parent=23 // pred_check_branch
          %184 = sbr.rel (%p182) target = $region28
        $region27: #{tpu_custom_call.1} parent=23 // pred_region
          %s185 = smul.u32 2, %s15
          %p186 = scmp.lt.s32.totalorder %s185, 3
          %s187 = scalar_select %p186, %s185, 3
          %s188 = smul.addr %s187, 8
          %s189 = scalar_lea.vmem %s0, %s188
          %s190 = smul.u32 2, %s15
        $region28: #{tpu_custom_call.1} parent=23 // pred_fallthru
          _
        // Predicated region
        $region29: #{tpu_custom_call.1} parent=23 // pred_check
          %p191 = pneg %p61
        $region30: #{tpu_custom_call.1} parent=23 // pred_check_branch
          %193 = sbr.rel (%p191) target = $region32
        $region31: #{tpu_custom_call.1} parent=23 // pred_region
          %s194 = smul.u32 2, %s15
          %p195 = scmp.lt.s32.totalorder %s194, 3
          %s196 = scalar_select %p195, %s194, 3
          %s197 = smul.addr %s196, 8
          %s198 = scalar_lea.vmem %s1, %s197
          %s199 = smul.u32 2, %s15
        $region32: #{tpu_custom_call.1} parent=23 // pred_fallthru
          _
      $region24: #{tpu_custom_call.1} parent=5 // pred_fallthru
        _
      %p200 = scmp.le.s32.totalorder 1, %s15
      %p201 = scmp.lt.s32.totalorder %s15, 3
      %p202 = pnand %p200, %p201
      %p203 = pneg %p202
      // Predicated region
      $region33: #{tpu_custom_call.1} parent=5 // pred_check
        _
      $region34: #{tpu_custom_call.1} parent=5 // pred_check_branch
        %205 = sbr.rel (%p202) target = $region36
      $region35: #{tpu_custom_call.1} parent=5 // pred_region
        %s206 = ssub.s32 %s15, 1
        // Predicated region
        $region37: #{tpu_custom_call.1} parent=35 // pred_check
          %p207 = pneg %p88
        $region38: #{tpu_custom_call.1} parent=35 // pred_check_branch
          %209 = sbr.rel (%p207) target = $region40
        $region39: #{tpu_custom_call.1} parent=35 // pred_region
          %211 = dma.done [#allocation3], 384
        $region40: #{tpu_custom_call.1} parent=35 // pred_fallthru
          _
        // Predicated region
        $region41: #{tpu_custom_call.1} parent=35 // pred_check
          %p212 = pneg %p109
        $region42: #{tpu_custom_call.1} parent=35 // pred_check_branch
          %214 = sbr.rel (%p212) target = $region44
        $region43: #{tpu_custom_call.1} parent=35 // pred_region
          %216 = dma.done [#allocation6], 4096
        $region44: #{tpu_custom_call.1} parent=35 // pred_fallthru
          _
        %s217 = smul.u32 2, %s20
        %p218 = scmp.lt.s32.totalorder %s217, 3
        %s219 = scalar_select %p218, %s217, 3
        %s220 = smul.addr %s219, 8
        %s221 = scalar_lea.vmem %s0, %s220
        %p222 = pneg %p41
        %p223 = pneg %p38
        %s224 = smul.u32 2, %s20
        %p225 = scmp.lt.s32.totalorder %s224, 3
        %s226 = scalar_select %p225, %s224, 3
        %s227 = smul.addr %s226, 8
        %s228 = scalar_lea.vmem %s1, %s227
        %p229 = pneg %p67
        %p230 = pneg %p64
        %p231 = pneg %p88
        %p232 = pneg %p85
        %p233 = pneg %p109
        %p234 = pneg %p106
        %p235 = pneg %p135
        %p236 = pneg %p132
        %s237 = sand.u32 %s122, 1
        %s238 = scalar_lea.sflag [#allocation4], %s237
        %s239 = sand.u32 %s122, 1
        %s240 = smul.addr %s239, 16
        %s241 = scalar_lea.vmem [#allocation7], %s240
        %s242 = smul.u32 2, %s20
        %p243 = scmp.lt.s32.totalorder %s242, 3
        %s244 = scalar_select %p243, %s242, 3
        %s245 = smul.addr %s244, 8
        %s246 = scalar_lea.vmem %s0, %s245
        %s247 = smul.u32 2, %s20
        %s248 = smul.u32 2, %s20
        %p249 = scmp.lt.s32.totalorder %s248, 3
        %s250 = scalar_select %p249, %s248, 3
        %s251 = smul.addr %s250, 8
        %s252 = scalar_lea.vmem %s1, %s251
        %s253 = smul.u32 2, %s20
        %s254 = smul.u32 2, %s20
        %v255 = vld [vmem:[%s246] sm:$0xff]
        %v256 = vld [vmem:[%s246 + $0x8] sm:$0xff]
        %v257 = vld [vmem:[%s252] sm:$0xff]
        %v258 = vld [vmem:[%s252 + $0x8] sm:$0xff]
        %v259 = vld [vmem:[#allocation2] sm:$0x1]
        %v260 = vld [vmem:[#allocation2 + $0x1] sm:$0x1]
        %261 = vadd.xlane.f32.xlu0 %v255
        %v262 = vpop.xlane.xlu0 %261
        %263 = vadd.xlane.f32.xlu0 %v256
        %v264 = vpop.xlane.xlu0 %263
        %v265 = vmul.f32 %v255, %v255
        %v266 = vmul.f32 %v256, %v256
        %267 = vadd.xlane.f32.xlu0 %v265
        %v268 = vpop.xlane.xlu0 %267
        %269 = vadd.xlane.f32.xlu0 %v266
        %v270 = vpop.xlane.xlu0 %269
        %v271 = vmul.f32 %v262, 0.03125
        %v272 = vmul.f32 %v264, 0.03125
        %v273 = vmul.f32 %v268, 0.03125
        %v274 = vmul.f32 %v270, 0.03125
        %v275 = vmul.f32 %v271, %v271
        %v276 = vmul.f32 %v272, %v272
        %v277 = vsub.f32 %v273, %v275
        %v278 = vsub.f32 %v274, %v276
        %v279 = vmax.f32 %v277, 0.0
        %v280 = vmax.f32 %v278, 0.0
        %v281 = vsub.f32 %v255, %v271
        %v282 = vsub.f32 %v256, %v272
        %v283 = vadd.f32 %v279, 1e-05
        %v284 = vadd.f32 %v280, 1e-05
        %v285 = vrsqrt.pop %v283
        %v286 = vmul.f32 %v285, %v283
        %v287 = vmul.f32 %v286, %v285
        %v288 = vmul.f32 0.5, %v287
        %v289 = vsub.f32 1.5, %v288
        %v290 = vmul.f32 %v285, %v289
        %vm291 = vweird.f32 %v283
        %vm292 = vweird.f32 %v285
        %vm293 = vmor %vm291, %vm292
        %v294 = vsel %vm293, %v285, %v290
        %v295 = vrsqrt.pop %v284
        %v296 = vmul.f32 %v295, %v284
        %v297 = vmul.f32 %v296, %v295
        %v298 = vmul.f32 0.5, %v297
        %v299 = vsub.f32 1.5, %v298
        %v300 = vmul.f32 %v295, %v299
        %vm301 = vweird.f32 %v284
        %vm302 = vweird.f32 %v295
        %vm303 = vmor %vm301, %vm302
        %v304 = vsel %vm303, %v295, %v300
        %v305 = vmul.f32 %v281, %v294
        %v306 = vmul.f32 %v282, %v304
        %v307 = vperm.slane %v259, 0
        %v308 = vmul.f32 %v305, %v307
        %v309 = vmul.f32 %v306, %v307
        %v310 = vperm.slane %v260, 0
        %v311 = vadd.f32 %v308, %v310
        %v312 = vadd.f32 %v309, %v310
        %314 = vset.pattern.permute.xlu0 0
        %315 = vperm.xlu0 %314, %v257
        %v316 = vpop.permute.xlu0 %315
        %319 = vset.pattern.permute.xlu0 0
        %320 = vperm.xlu0 %319, %v258
        %v321 = vpop.permute.xlu0 %320
        %v323 = vmul.f32 %v311, %v316
        %v324 = vmul.f32 %v312, %v321
        %v325 = vld [vmem:[#allocation2 + $0x4] sm:$0x1]
        %v326 = vperm.slane %v325, 0
        %v327 = vmul.f32 %v323, %v326
        %v328 = vmul.f32 %v324, %v326
        %v329 = vrot.slane %v323, 6
        %v330 = vrot.slane %v324, 6
        %v331 = vlaneseq
        %v332 = vshrl.u32 %v331, 7
        %vm333 = vcmp.lt.s32.totalorder %v332, 2
        %v334 = vsel %vm333, %v329, %v330
        %v335 = vsel %vm333, %v330, %v329
        %336 = vset.pattern.permute.xlu0 1
        %337 = vperm.xlu0 %336, %v257
        %v338 = vpop.permute.xlu0 %337
        %340 = vset.pattern.permute.xlu0 1
        %341 = vperm.xlu0 %340, %v258
        %v342 = vpop.permute.xlu0 %341
        %v344 = vmul.f32 %v335, %v338
        %v345 = vmul.f32 %v334, %v342
        %v346 = vld [vmem:[#allocation2 + $0x2] sm:$0x1]
        %v347 = vperm.slane %v346, 0
        %v348 = vmul.f32 %v344, %v347
        %v349 = vmul.f32 %v345, %v347
        %v350 = vadd.f32 %v327, %v348
        %v351 = vadd.f32 %v328, %v349
        %v352 = vrot.slane %v323, 7
        %v353 = vrot.slane %v324, 7
        %vm354 = vcmp.lt.s32.totalorder %v332, 1
        %v355 = vsel %vm354, %v352, %v353
        %v356 = vsel %vm354, %v353, %v352
        %357 = vset.pattern.permute.xlu0 2
        %358 = vperm.xlu0 %357, %v257
        %v359 = vpop.permute.xlu0 %358
        %361 = vset.pattern.permute.xlu0 2
        %362 = vperm.xlu0 %361, %v258
        %v363 = vpop.permute.xlu0 %362
        %v365 = vmul.f32 %v356, %v359
        %v366 = vmul.f32 %v355, %v363
        %v367 = vld [vmem:[#allocation2 + $0x3] sm:$0x1]
        %v368 = vperm.slane %v367, 0
        %v369 = vmul.f32 %v365, %v368
        %v370 = vmul.f32 %v366, %v368
        %v371 = vadd.f32 %v350, %v369
        %v372 = vadd.f32 %v351, %v370
        %v373 = vrot.slane %v323, 1
        %v374 = vrot.slane %v324, 1
        %vm375 = vcmp.lt.s32.totalorder %v332, 7
        %v376 = vsel %vm375, %v373, %v374
        %v377 = vsel %vm375, %v374, %v373
        %378 = vset.pattern.permute.xlu0 3
        %379 = vperm.xlu0 %378, %v257
        %v380 = vpop.permute.xlu0 %379
        %382 = vset.pattern.permute.xlu0 3
        %383 = vperm.xlu0 %382, %v258
        %v384 = vpop.permute.xlu0 %383
        %v386 = vmul.f32 %v376, %v380
        %v387 = vmul.f32 %v377, %v384
        %v388 = vld [vmem:[#allocation2 + $0x5] sm:$0x1]
        %v389 = vperm.slane %v388, 0
        %v390 = vmul.f32 %v386, %v389
        %v391 = vmul.f32 %v387, %v389
        %v392 = vadd.f32 %v371, %v390
        %v393 = vadd.f32 %v372, %v391
        %v394 = vrot.slane %v323, 2
        %v395 = vrot.slane %v324, 2
        %vm396 = vcmp.lt.s32.totalorder %v332, 6
        %v397 = vsel %vm396, %v394, %v395
        %v398 = vsel %vm396, %v395, %v394
        %399 = vset.pattern.permute.xlu0 4
        %400 = vperm.xlu0 %399, %v257
        %v401 = vpop.permute.xlu0 %400
        %403 = vset.pattern.permute.xlu0 4
        %404 = vperm.xlu0 %403, %v258
        %v405 = vpop.permute.xlu0 %404
        %v407 = vmul.f32 %v397, %v401
        %v408 = vmul.f32 %v398, %v405
        %v409 = vld [vmem:[#allocation2 + $0x6] sm:$0x1]
        %v410 = vperm.slane %v409, 0
        %v411 = vmul.f32 %v407, %v410
        %v412 = vmul.f32 %v408, %v410
        %v413 = vadd.f32 %v392, %v411
        %v414 = vadd.f32 %v393, %v412
        %v415 = vpack.c.bf16 %v414, %v413
        %v416 = vld [vmem:[#allocation5] sm:$0xf]
        %v417 = vld [vmem:[#allocation5 + $0x4] sm:$0xf]
        %v418 = vld [vmem:[#allocation5 + $0x8] sm:$0xf]
        %v419 = vld [vmem:[#allocation5 + $0xc] sm:$0xf]
        %v420 = vld [vmem:[#allocation5 + $0x10] sm:$0xf]
        %v421 = vld [vmem:[#allocation5 + $0x14] sm:$0xf]
        %v422 = vld [vmem:[#allocation5 + $0x18] sm:$0xf]
        %v423 = vld [vmem:[#allocation5 + $0x1c] sm:$0xf]
        %v424 = vld [vmem:[#allocation5 + $0x20] sm:$0xf]
        %v425 = vld [vmem:[#allocation5 + $0x24] sm:$0xf]
        %v426 = vld [vmem:[#allocation5 + $0x28] sm:$0xf]
        %v427 = vld [vmem:[#allocation5 + $0x2c] sm:$0xf]
        %v428 = vld [vmem:[#allocation5 + $0x30] sm:$0xf]
        %v429 = vld [vmem:[#allocation5 + $0x34] sm:$0xf]
        %v430 = vld [vmem:[#allocation5 + $0x38] sm:$0xf]
        %v431 = vld [vmem:[#allocation5 + $0x3c] sm:$0xf]
        %v448 = vunpack.c.l.b16 %v416
        %v449 = vunpack.c.l.b16 %v417
        %v450 = vunpack.c.l.b16 %v418
        %v451 = vunpack.c.l.b16 %v419
        %v452 = vunpack.c.l.b16 %v420
        %v453 = vunpack.c.l.b16 %v421
        %v454 = vunpack.c.l.b16 %v422
        %v455 = vunpack.c.l.b16 %v423
        %v456 = vunpack.c.l.b16 %v424
        %v457 = vunpack.c.l.b16 %v425
        %v458 = vunpack.c.l.b16 %v426
        %v459 = vunpack.c.l.b16 %v427
        %v460 = vunpack.c.l.b16 %v428
        %v461 = vunpack.c.l.b16 %v429
        %v462 = vunpack.c.l.b16 %v430
        %v463 = vunpack.c.l.b16 %v431
        %v464 = vpack.c.b16 %v449, %v448
        %v465 = vpack.c.b16 %v451, %v450
        %v466 = vpack.c.b16 %v453, %v452
        %v467 = vpack.c.b16 %v455, %v454
        %v468 = vpack.c.b16 %v457, %v456
        %v469 = vpack.c.b16 %v459, %v458
        %v470 = vpack.c.b16 %v461, %v460
        %v471 = vpack.c.b16 %v463, %v462
        %480 = vmatpush.bf16.msra.mxu0 %v471
        %481 = vmatpush.bf16.msra.mxu0 %v470
        %482 = vmatpush.bf16.msra.mxu0 %v469
        %483 = vmatpush.bf16.msra.mxu0 %v468
        %484 = vmatpush.bf16.msra.mxu0 %v467
        %485 = vmatpush.bf16.msra.mxu0 %v466
        %486 = vmatpush.bf16.msra.mxu0 %v465
        %487 = vmatpush.bf16.msra.mxu0 %v464
        %488 = vmatmul.bf16.gmra.mxu0 %v415
        %v489 = vpop.f32.mrf.mxu0
        %v490 = vadd.f32 0.0, %v489
        %v491 = vpop.f32.mrf.mxu0
        %v492 = vadd.f32 0.0, %v491
        %493 = vdwg.mxu0
        %v494 = vmax.f32 %v490, 0.0
        %v495 = vmax.f32 %v492, 0.0
        %v496 = vld [vmem:[#allocation2 + $0x9] sm:$0x1]
        %v497 = vperm.slane %v496, 0
        %v498 = vmul.f32 %v494, %v497
        %v499 = vmul.f32 %v495, %v497
        %v500 = vrot.slane %v494, 6
        %v501 = vrot.slane %v495, 6
        %v502 = vsel %vm333, %v500, %v501
        %v503 = vsel %vm333, %v501, %v500
        %v504 = vmul.f32 %v503, %v338
        %v505 = vmul.f32 %v502, %v342
        %v506 = vld [vmem:[#allocation2 + $0x7] sm:$0x1]
        %v507 = vperm.slane %v506, 0
        %v508 = vmul.f32 %v504, %v507
        %v509 = vmul.f32 %v505, %v507
        %v510 = vadd.f32 %v498, %v508
        %v511 = vadd.f32 %v499, %v509
        %v512 = vrot.slane %v494, 7
        %v513 = vrot.slane %v495, 7
        %v514 = vsel %vm354, %v512, %v513
        %v515 = vsel %vm354, %v513, %v512
        %v516 = vmul.f32 %v515, %v359
        %v517 = vmul.f32 %v514, %v363
        %v518 = vld [vmem:[#allocation2 + $0x8] sm:$0x1]
        %v519 = vperm.slane %v518, 0
        %v520 = vmul.f32 %v516, %v519
        %v521 = vmul.f32 %v517, %v519
        %v522 = vadd.f32 %v510, %v520
        %v523 = vadd.f32 %v511, %v521
        %v524 = vrot.slane %v494, 1
        %v525 = vrot.slane %v495, 1
        %v526 = vsel %vm375, %v524, %v525
        %v527 = vsel %vm375, %v525, %v524
        %v528 = vmul.f32 %v526, %v380
        %v529 = vmul.f32 %v527, %v384
        %v530 = vld [vmem:[#allocation2 + $0xa] sm:$0x1]
        %v531 = vperm.slane %v530, 0
        %v532 = vmul.f32 %v528, %v531
        %v533 = vmul.f32 %v529, %v531
        %v534 = vadd.f32 %v522, %v532
        %v535 = vadd.f32 %v523, %v533
        %v536 = vrot.slane %v494, 2
        %v537 = vrot.slane %v495, 2
        %v538 = vsel %vm396, %v536, %v537
        %v539 = vsel %vm396, %v537, %v536
        %v540 = vmul.f32 %v538, %v401
        %v541 = vmul.f32 %v539, %v405
        %v542 = vld [vmem:[#allocation2 + $0xb] sm:$0x1]
        %v543 = vperm.slane %v542, 0
        %v544 = vmul.f32 %v540, %v543
        %v545 = vmul.f32 %v541, %v543
        %v546 = vadd.f32 %v534, %v544
        %v547 = vadd.f32 %v535, %v545
        %v548 = vpack.c.bf16 %v547, %v546
        %v549 = vld [vmem:[#allocation5 + $0x40] sm:$0xf]
        %v550 = vld [vmem:[#allocation5 + $0x44] sm:$0xf]
        %v551 = vld [vmem:[#allocation5 + $0x48] sm:$0xf]
        %v552 = vld [vmem:[#allocation5 + $0x4c] sm:$0xf]
        %v553 = vld [vmem:[#allocation5 + $0x50] sm:$0xf]
        %v554 = vld [vmem:[#allocation5 + $0x54] sm:$0xf]
        %v555 = vld [vmem:[#allocation5 + $0x58] sm:$0xf]
        %v556 = vld [vmem:[#allocation5 + $0x5c] sm:$0xf]
        %v557 = vld [vmem:[#allocation5 + $0x60] sm:$0xf]
        %v558 = vld [vmem:[#allocation5 + $0x64] sm:$0xf]
        %v559 = vld [vmem:[#allocation5 + $0x68] sm:$0xf]
        %v560 = vld [vmem:[#allocation5 + $0x6c] sm:$0xf]
        %v561 = vld [vmem:[#allocation5 + $0x70] sm:$0xf]
        %v562 = vld [vmem:[#allocation5 + $0x74] sm:$0xf]
        %v563 = vld [vmem:[#allocation5 + $0x78] sm:$0xf]
        %v564 = vld [vmem:[#allocation5 + $0x7c] sm:$0xf]
        %v581 = vunpack.c.l.b16 %v549
        %v582 = vunpack.c.l.b16 %v550
        %v583 = vunpack.c.l.b16 %v551
        %v584 = vunpack.c.l.b16 %v552
        %v585 = vunpack.c.l.b16 %v553
        %v586 = vunpack.c.l.b16 %v554
        %v587 = vunpack.c.l.b16 %v555
        %v588 = vunpack.c.l.b16 %v556
        %v589 = vunpack.c.l.b16 %v557
        %v590 = vunpack.c.l.b16 %v558
        %v591 = vunpack.c.l.b16 %v559
        %v592 = vunpack.c.l.b16 %v560
        %v593 = vunpack.c.l.b16 %v561
        %v594 = vunpack.c.l.b16 %v562
        %v595 = vunpack.c.l.b16 %v563
        %v596 = vunpack.c.l.b16 %v564
        %v597 = vpack.c.b16 %v582, %v581
        %v598 = vpack.c.b16 %v584, %v583
        %v599 = vpack.c.b16 %v586, %v585
        %v600 = vpack.c.b16 %v588, %v587
        %v601 = vpack.c.b16 %v590, %v589
        %v602 = vpack.c.b16 %v592, %v591
        %v603 = vpack.c.b16 %v594, %v593
        %v604 = vpack.c.b16 %v596, %v595
        %613 = vmatpush.bf16.msra.mxu0 %v604
        %614 = vmatpush.bf16.msra.mxu0 %v603
        %615 = vmatpush.bf16.msra.mxu0 %v602
        %616 = vmatpush.bf16.msra.mxu0 %v601
        %617 = vmatpush.bf16.msra.mxu0 %v600
        %618 = vmatpush.bf16.msra.mxu0 %v599
        %619 = vmatpush.bf16.msra.mxu0 %v598
        %620 = vmatpush.bf16.msra.mxu0 %v597
        %621 = vmatmul.bf16.gmra.mxu0 %v548
        %v622 = vpop.f32.mrf.mxu0
        %v623 = vadd.f32 0.0, %v622
        %v624 = vpop.f32.mrf.mxu0
        %v625 = vadd.f32 0.0, %v624
        %626 = vdwg.mxu0
        %v627 = vmax.f32 %v623, 0.0
        %v628 = vmax.f32 %v625, 0.0
        %v629 = vadd.f32 %v255, %v627
        %v630 = vadd.f32 %v256, %v628
        %v631 = vld [vmem:[#allocation2 + $0xc] sm:$0x1]
        %v632 = vld [vmem:[#allocation2 + $0xd] sm:$0x1]
        %633 = vadd.xlane.f32.xlu0 %v629
        %v634 = vpop.xlane.xlu0 %633
        %635 = vadd.xlane.f32.xlu0 %v630
        %v636 = vpop.xlane.xlu0 %635
        %v637 = vmul.f32 %v629, %v629
        %v638 = vmul.f32 %v630, %v630
        %639 = vadd.xlane.f32.xlu0 %v637
        %v640 = vpop.xlane.xlu0 %639
        %641 = vadd.xlane.f32.xlu0 %v638
        %v642 = vpop.xlane.xlu0 %641
        %v643 = vmul.f32 %v634, 0.03125
        %v644 = vmul.f32 %v636, 0.03125
        %v645 = vmul.f32 %v640, 0.03125
        %v646 = vmul.f32 %v642, 0.03125
        %v647 = vmul.f32 %v643, %v643
        %v648 = vmul.f32 %v644, %v644
        %v649 = vsub.f32 %v645, %v647
        %v650 = vsub.f32 %v646, %v648
        %v651 = vmax.f32 %v649, 0.0
        %v652 = vmax.f32 %v650, 0.0
        %v653 = vsub.f32 %v629, %v643
        %v654 = vsub.f32 %v630, %v644
        %v655 = vadd.f32 %v651, 1e-05
        %v656 = vadd.f32 %v652, 1e-05
        %v657 = vrsqrt.pop %v655
        %v658 = vmul.f32 %v657, %v655
        %v659 = vmul.f32 %v658, %v657
        %v660 = vmul.f32 0.5, %v659
        %v661 = vsub.f32 1.5, %v660
        %v662 = vmul.f32 %v657, %v661
        %vm663 = vweird.f32 %v655
        %vm664 = vweird.f32 %v657
        %vm665 = vmor %vm663, %vm664
        %v666 = vsel %vm665, %v657, %v662
        %v667 = vrsqrt.pop %v656
        %v668 = vmul.f32 %v667, %v656
        %v669 = vmul.f32 %v668, %v667
        %v670 = vmul.f32 0.5, %v669
        %v671 = vsub.f32 1.5, %v670
        %v672 = vmul.f32 %v667, %v671
        %vm673 = vweird.f32 %v656
        %vm674 = vweird.f32 %v667
        %vm675 = vmor %vm673, %vm674
        %v676 = vsel %vm675, %v667, %v672
        %v677 = vmul.f32 %v653, %v666
        %v678 = vmul.f32 %v654, %v676
        %v679 = vperm.slane %v631, 0
        %v680 = vmul.f32 %v677, %v679
        %v681 = vmul.f32 %v678, %v679
        %v682 = vperm.slane %v632, 0
        %v683 = vadd.f32 %v680, %v682
        %v684 = vadd.f32 %v681, %v682
        %v685 = vmul.f32 %v683, %v316
        %v686 = vmul.f32 %v684, %v321
        %v687 = vld [vmem:[#allocation2 + $0xf] sm:$0x1]
        %v688 = vperm.slane %v687, 0
        %v689 = vmul.f32 %v685, %v688
        %v690 = vmul.f32 %v686, %v688
        %v691 = vrot.slane %v685, 7
        %v692 = vrot.slane %v686, 7
        %v693 = vsel %vm354, %v691, %v692
        %v694 = vsel %vm354, %v692, %v691
        %v695 = vmul.f32 %v694, %v359
        %v696 = vmul.f32 %v693, %v363
        %v697 = vld [vmem:[#allocation2 + $0xe] sm:$0x1]
        %v698 = vperm.slane %v697, 0
        %v699 = vmul.f32 %v695, %v698
        %v700 = vmul.f32 %v696, %v698
        %v701 = vadd.f32 %v689, %v699
        %v702 = vadd.f32 %v690, %v700
        %v703 = vrot.slane %v685, 1
        %v704 = vrot.slane %v686, 1
        %v705 = vsel %vm375, %v703, %v704
        %v706 = vsel %vm375, %v704, %v703
        %v707 = vmul.f32 %v705, %v380
        %v708 = vmul.f32 %v706, %v384
        %v709 = vld [vmem:[#allocation2 + $0x10] sm:$0x1]
        %v710 = vperm.slane %v709, 0
        %v711 = vmul.f32 %v707, %v710
        %v712 = vmul.f32 %v708, %v710
        %v713 = vadd.f32 %v701, %v711
        %v714 = vadd.f32 %v702, %v712
        %v715 = vpack.c.bf16 %v714, %v713
        %v716 = vld [vmem:[#allocation5 + $0x80] sm:$0xf]
        %v717 = vld [vmem:[#allocation5 + $0x84] sm:$0xf]
        %v718 = vld [vmem:[#allocation5 + $0x88] sm:$0xf]
        %v719 = vld [vmem:[#allocation5 + $0x8c] sm:$0xf]
        %v720 = vld [vmem:[#allocation5 + $0x90] sm:$0xf]
        %v721 = vld [vmem:[#allocation5 + $0x94] sm:$0xf]
        %v722 = vld [vmem:[#allocation5 + $0x98] sm:$0xf]
        %v723 = vld [vmem:[#allocation5 + $0x9c] sm:$0xf]
        %v724 = vld [vmem:[#allocation5 + $0xa0] sm:$0xf]
        %v725 = vld [vmem:[#allocation5 + $0xa4] sm:$0xf]
        %v726 = vld [vmem:[#allocation5 + $0xa8] sm:$0xf]
        %v727 = vld [vmem:[#allocation5 + $0xac] sm:$0xf]
        %v728 = vld [vmem:[#allocation5 + $0xb0] sm:$0xf]
        %v729 = vld [vmem:[#allocation5 + $0xb4] sm:$0xf]
        %v730 = vld [vmem:[#allocation5 + $0xb8] sm:$0xf]
        %v731 = vld [vmem:[#allocation5 + $0xbc] sm:$0xf]
        %v748 = vunpack.c.l.b16 %v716
        %v749 = vunpack.c.l.b16 %v717
        %v750 = vunpack.c.l.b16 %v718
        %v751 = vunpack.c.l.b16 %v719
        %v752 = vunpack.c.l.b16 %v720
        %v753 = vunpack.c.l.b16 %v721
        %v754 = vunpack.c.l.b16 %v722
        %v755 = vunpack.c.l.b16 %v723
        %v756 = vunpack.c.l.b16 %v724
        %v757 = vunpack.c.l.b16 %v725
        %v758 = vunpack.c.l.b16 %v726
        %v759 = vunpack.c.l.b16 %v727
        %v760 = vunpack.c.l.b16 %v728
        %v761 = vunpack.c.l.b16 %v729
        %v762 = vunpack.c.l.b16 %v730
        %v763 = vunpack.c.l.b16 %v731
        %v764 = vpack.c.b16 %v749, %v748
        %v765 = vpack.c.b16 %v751, %v750
        %v766 = vpack.c.b16 %v753, %v752
        %v767 = vpack.c.b16 %v755, %v754
        %v768 = vpack.c.b16 %v757, %v756
        %v769 = vpack.c.b16 %v759, %v758
        %v770 = vpack.c.b16 %v761, %v760
        %v771 = vpack.c.b16 %v763, %v762
        %780 = vmatpush.bf16.msra.mxu0 %v771
        %781 = vmatpush.bf16.msra.mxu0 %v770
        %782 = vmatpush.bf16.msra.mxu0 %v769
        %783 = vmatpush.bf16.msra.mxu0 %v768
        %784 = vmatpush.bf16.msra.mxu0 %v767
        %785 = vmatpush.bf16.msra.mxu0 %v766
        %786 = vmatpush.bf16.msra.mxu0 %v765
        %787 = vmatpush.bf16.msra.mxu0 %v764
        %788 = vmatmul.bf16.gmra.mxu0 %v715
        %v789 = vpop.f32.mrf.mxu0
        %v790 = vadd.f32 0.0, %v789
        %v791 = vpop.f32.mrf.mxu0
        %v792 = vadd.f32 0.0, %v791
        %793 = vdwg.mxu0
        %v794 = vmax.f32 %v790, 0.0
        %v795 = vmax.f32 %v792, 0.0
        %v796 = vld [vmem:[#allocation2 + $0x12] sm:$0x1]
        %v797 = vperm.slane %v796, 0
        %v798 = vmul.f32 %v794, %v797
        %v799 = vmul.f32 %v795, %v797
        %v800 = vrot.slane %v794, 7
        %v801 = vrot.slane %v795, 7
        %v802 = vsel %vm354, %v800, %v801
        %v803 = vsel %vm354, %v801, %v800
        %v804 = vmul.f32 %v803, %v359
        %v805 = vmul.f32 %v802, %v363
        %v806 = vld [vmem:[#allocation2 + $0x11] sm:$0x1]
        %v807 = vperm.slane %v806, 0
        %v808 = vmul.f32 %v804, %v807
        %v809 = vmul.f32 %v805, %v807
        %v810 = vadd.f32 %v798, %v808
        %v811 = vadd.f32 %v799, %v809
        %v812 = vrot.slane %v794, 1
        %v813 = vrot.slane %v795, 1
        %v814 = vsel %vm375, %v812, %v813
        %v815 = vsel %vm375, %v813, %v812
        %v816 = vmul.f32 %v814, %v380
        %v817 = vmul.f32 %v815, %v384
        %v818 = vld [vmem:[#allocation2 + $0x13] sm:$0x1]
        %v819 = vperm.slane %v818, 0
        %v820 = vmul.f32 %v816, %v819
        %v821 = vmul.f32 %v817, %v819
        %v822 = vadd.f32 %v810, %v820
        %v823 = vadd.f32 %v811, %v821
        %v824 = vpack.c.bf16 %v823, %v822
        %v825 = vld [vmem:[#allocation5 + $0xc0] sm:$0xf]
        %v826 = vld [vmem:[#allocation5 + $0xc4] sm:$0xf]
        %v827 = vld [vmem:[#allocation5 + $0xc8] sm:$0xf]
        %v828 = vld [vmem:[#allocation5 + $0xcc] sm:$0xf]
        %v829 = vld [vmem:[#allocation5 + $0xd0] sm:$0xf]
        %v830 = vld [vmem:[#allocation5 + $0xd4] sm:$0xf]
        %v831 = vld [vmem:[#allocation5 + $0xd8] sm:$0xf]
        %v832 = vld [vmem:[#allocation5 + $0xdc] sm:$0xf]
        %v833 = vld [vmem:[#allocation5 + $0xe0] sm:$0xf]
        %v834 = vld [vmem:[#allocation5 + $0xe4] sm:$0xf]
        %v835 = vld [vmem:[#allocation5 + $0xe8] sm:$0xf]
        %v836 = vld [vmem:[#allocation5 + $0xec] sm:$0xf]
        %v837 = vld [vmem:[#allocation5 + $0xf0] sm:$0xf]
        %v838 = vld [vmem:[#allocation5 + $0xf4] sm:$0xf]
        %v839 = vld [vmem:[#allocation5 + $0xf8] sm:$0xf]
        %v840 = vld [vmem:[#allocation5 + $0xfc] sm:$0xf]
        %v857 = vunpack.c.l.b16 %v825
        %v858 = vunpack.c.l.b16 %v826
        %v859 = vunpack.c.l.b16 %v827
        %v860 = vunpack.c.l.b16 %v828
        %v861 = vunpack.c.l.b16 %v829
        %v862 = vunpack.c.l.b16 %v830
        %v863 = vunpack.c.l.b16 %v831
        %v864 = vunpack.c.l.b16 %v832
        %v865 = vunpack.c.l.b16 %v833
        %v866 = vunpack.c.l.b16 %v834
        %v867 = vunpack.c.l.b16 %v835
        %v868 = vunpack.c.l.b16 %v836
        %v869 = vunpack.c.l.b16 %v837
        %v870 = vunpack.c.l.b16 %v838
        %v871 = vunpack.c.l.b16 %v839
        %v872 = vunpack.c.l.b16 %v840
        %v873 = vpack.c.b16 %v858, %v857
        %v874 = vpack.c.b16 %v860, %v859
        %v875 = vpack.c.b16 %v862, %v861
        %v876 = vpack.c.b16 %v864, %v863
        %v877 = vpack.c.b16 %v866, %v865
        %v878 = vpack.c.b16 %v868, %v867
        %v879 = vpack.c.b16 %v870, %v869
        %v880 = vpack.c.b16 %v872, %v871
        %889 = vmatpush.bf16.msra.mxu0 %v880
        %890 = vmatpush.bf16.msra.mxu0 %v879
        %891 = vmatpush.bf16.msra.mxu0 %v878
        %892 = vmatpush.bf16.msra.mxu0 %v877
        %893 = vmatpush.bf16.msra.mxu0 %v876
        %894 = vmatpush.bf16.msra.mxu0 %v875
        %895 = vmatpush.bf16.msra.mxu0 %v874
        %896 = vmatpush.bf16.msra.mxu0 %v873
        %897 = vmatmul.bf16.gmra.mxu0 %v824
        %v898 = vpop.f32.mrf.mxu0
        %v899 = vadd.f32 0.0, %v898
        %v900 = vpop.f32.mrf.mxu0
        %v901 = vadd.f32 0.0, %v900
        %902 = vdwg.mxu0
        %v903 = vmax.f32 %v899, 0.0
        %v904 = vmax.f32 %v901, 0.0
        %v905 = vadd.f32 %v629, %v903
        %v906 = vadd.f32 %v630, %v904
        %v907 = vld [vmem:[#allocation2 + $0x14] sm:$0x1]
        %v908 = vld [vmem:[#allocation2 + $0x15] sm:$0x1]
        %909 = vadd.xlane.f32.xlu0 %v905
        %v910 = vpop.xlane.xlu0 %909
        %911 = vadd.xlane.f32.xlu0 %v906
        %v912 = vpop.xlane.xlu0 %911
        %v913 = vmul.f32 %v905, %v905
        %v914 = vmul.f32 %v906, %v906
        %915 = vadd.xlane.f32.xlu0 %v913
        %v916 = vpop.xlane.xlu0 %915
        %917 = vadd.xlane.f32.xlu0 %v914
        %v918 = vpop.xlane.xlu0 %917
        %v919 = vmul.f32 %v910, 0.03125
        %v920 = vmul.f32 %v912, 0.03125
        %v921 = vmul.f32 %v916, 0.03125
        %v922 = vmul.f32 %v918, 0.03125
        %v923 = vmul.f32 %v919, %v919
        %v924 = vmul.f32 %v920, %v920
        %v925 = vsub.f32 %v921, %v923
        %v926 = vsub.f32 %v922, %v924
        %v927 = vmax.f32 %v925, 0.0
        %v928 = vmax.f32 %v926, 0.0
        %v929 = vsub.f32 %v905, %v919
        %v930 = vsub.f32 %v906, %v920
        %v931 = vadd.f32 %v927, 1e-05
        %v932 = vadd.f32 %v928, 1e-05
        %v933 = vrsqrt.pop %v931
        %v934 = vmul.f32 %v933, %v931
        %v935 = vmul.f32 %v934, %v933
        %v936 = vmul.f32 0.5, %v935
        %v937 = vsub.f32 1.5, %v936
        %v938 = vmul.f32 %v933, %v937
        %vm939 = vweird.f32 %v931
        %vm940 = vweird.f32 %v933
        %vm941 = vmor %vm939, %vm940
        %v942 = vsel %vm941, %v933, %v938
        %v943 = vrsqrt.pop %v932
        %v944 = vmul.f32 %v943, %v932
        %v945 = vmul.f32 %v944, %v943
        %v946 = vmul.f32 0.5, %v945
        %v947 = vsub.f32 1.5, %v946
        %v948 = vmul.f32 %v943, %v947
        %vm949 = vweird.f32 %v932
        %vm950 = vweird.f32 %v943
        %vm951 = vmor %vm949, %vm950
        %v952 = vsel %vm951, %v943, %v948
        %v953 = vmul.f32 %v929, %v942
        %v954 = vmul.f32 %v930, %v952
        %v955 = vperm.slane %v907, 0
        %v956 = vmul.f32 %v953, %v955
        %v957 = vmul.f32 %v954, %v955
        %v958 = vperm.slane %v908, 0
        %v959 = vadd.f32 %v956, %v958
        %v960 = vadd.f32 %v957, %v958
        %v961 = vmul.f32 %v959, %v316
        %v962 = vmul.f32 %v960, %v321
        %963 = vst [vmem:[%s241] sm:$0xff] %v961
        %964 = vst [vmem:[%s241 + $0x8] sm:$0xff] %v962
        %s965 = sand.u32 %s122, 1
        %s966 = scalar_lea.sflag [#allocation4], %s965
        %s967 = sand.u32 %s122, 1
        %s968 = smul.addr %s967, 16
        %s969 = scalar_lea.vmem [#allocation7], %s968
        // Predicated region
        $region45: #{tpu_custom_call.1} parent=35 // pred_check
          %p970 = pneg %p132
        $region46: #{tpu_custom_call.1} parent=35 // pred_check_branch
          %972 = sbr.rel (%p970) target = $region48
        $region47: #{tpu_custom_call.1} parent=35 // pred_region
          %s973 = smul.u32 2, %s20
          %975 = vsyncadd %s966, 0
          %s976 = smul.addr %s973, 8
          %s977 = scalar_lea.hbm %s4, %s976
          %s978 = sshll.u32 %s969, 4
          %s979 = int_to_ptr.vmem [resolvable:$true] %s978
          %s980 = sshll.u32 %s977, 4
          %s981 = int_to_ptr.hbm [resolvable:$true] %s980
          %986 = dma.vmem_to_hbm [thread:$0]  %s979, 256, %s981, %s966, 128, 128, 8
        $region48: #{tpu_custom_call.1} parent=35 // pred_fallthru
          _
      $region36: #{tpu_custom_call.1} parent=5 // pred_fallthru
        _
      %p987 = scmp.le.s32.totalorder 2, %s15
      // Predicated region
      $region49: #{tpu_custom_call.1} parent=5 // pred_check
        %p988 = pneg %p987
      $region50: #{tpu_custom_call.1} parent=5 // pred_check_branch
        %990 = sbr.rel (%p988) target = $region52
      $region51: #{tpu_custom_call.1} parent=5 // pred_region
        %s991 = ssub.s32 %s15, 2
        // Predicated region
        $region53: #{tpu_custom_call.1} parent=51 // pred_check
          %p992 = pneg %p138
        $region54: #{tpu_custom_call.1} parent=51 // pred_check_branch
          %994 = sbr.rel (%p992) target = $region56
        $region55: #{tpu_custom_call.1} parent=51 // pred_region
          %s995 = sand.u32 %s123, 1
          %s996 = scalar_lea.sflag [#allocation4], %s995
          %s997 = sand.u32 %s123, 1
          %s998 = smul.addr %s997, 16
          %s999 = scalar_lea.vmem [#allocation7], %s998
          %1001 = dma.done %s996, 256
        $region56: #{tpu_custom_call.1} parent=51 // pred_fallthru
          _
      $region52: #{tpu_custom_call.1} parent=5 // pred_fallthru
        _
    $region6: #{tpu_custom_call.1} parent=1 // loop_footer
      %s19 = sadd.s32 1, %s15
    $region7: #{tpu_custom_call.1} parent=1 // loop_footer_branch
      %14 = sbr.rel target = $region3
    $region8: #{tpu_custom_call.1} parent=1 // loop_exit
      _
    %1002 = vsyncpa [#allocation3], 1
    %s1003 = scalar_lea.sflag [#allocation3], 1
    %1004 = vsyncpa %s1003, 1
    %1005 = vsyncpa [#allocation6], 1
    %1006 = vsyncpa [#allocation4], 1
    %s1007 = scalar_lea.sflag [#allocation4], 1
    %1008 = vsyncpa %s1007, 1

</llo_original>
